<compile_context>
chip_gen: v6e
topology: v6e:2x2x1
jax: 0.10.0
libtpu: 0.0.40
codegen_flags: <defaults>
</compile_context>

<pallas_src>
import jax
import jax.numpy as jnp
import numpy as np
from jax.experimental import pallas as pl
from jax.experimental.pallas import tpu as pltpu

# ---- module globals (n_class / n_hidden in the PyTorch script) -------------
N_CLASS = 8
N_HIDDEN = 32
BATCH = 3        # PyTorch code hardcodes temp = zeros((3, ...)) -> batch = 3
SEQ_LEN = 8

_AUG = 16        # padded width of the augmented input block (C + 1 bias col)


def textrnn_kernel(x_ref, a_ref, b_ref, out_ref):
    """Two peeled RNN steps (only h at t==1 is consumed) + linear head.

    x_ref  : [2B, 16]  rows 0..B-1 = x_t0, rows B..2B-1 = x_t1;
                       column C holds the constant 1 (bias column), rest 0.
    a_ref  : [48, H]   rows  0..15 = [wih.T ; (bih+bhh) ; zero-pad] (augmented)
                       rows 16..47 = whh.T
    b_ref  : [40, NC]  rows 0..31 = wlin.T, row 32 = blin + ones-param, rest 0
    out_ref: [B, NC]
    """
    B = out_ref.shape[0]

    # One fused input projection for both timesteps; the RNN bias is folded
    # in via the augmented 1-column of x / bias row of the weight slab.
    xw = jnp.dot(x_ref[...], a_ref[0:_AUG, :],
                 preferred_element_type=jnp.float32)            # [2B, H]

    # t = 0: h_{-1} = 0 (PyTorch default), so the recurrent term vanishes.
    h0 = jnp.tanh(xw[:B, :])

    # t = 1: this is outputs[:, 1, :].
    h1 = jnp.tanh(xw[B:2 * B, :]
                  + jnp.dot(h0, a_ref[_AUG:, :],
                            preferred_element_type=jnp.float32))

    # Linear head + folded bias (linear bias + extra ones parameter).
    out_ref[...] = (jnp.dot(h1, b_ref[0:N_HIDDEN, :],
                            preferred_element_type=jnp.float32)
                    + b_ref[N_HIDDEN:N_HIDDEN + 1, :])


def prepare_params(params):
    """One-time packing of the 7 PyTorch parameters into 2 aligned slabs."""
    wih, whh, bih, bhh, wlin, blin, bext = params
    C, H, NC = N_CLASS, N_HIDDEN, N_CLASS

    # Augmented input->hidden block: wih.T on rows 0..C-1, folded RNN bias on
    # row C, zeros up to row 15 so whh.T starts at a sublane multiple of 8.
    w_in_aug = jnp.zeros((_AUG, H), jnp.float32)
    w_in_aug = w_in_aug.at[:C, :].set(wih.T)
    w_in_aug = w_in_aug.at[C, :].set(bih + bhh)
    slab_a = jnp.concatenate([w_in_aug, whh.T], axis=0)          # [48, H]

    # Head slab: wlin.T on rows 0..H-1, folded head bias on row H, zero pad.
    slab_b = jnp.zeros((40, NC), jnp.float32)
    slab_b = slab_b.at[:H, :].set(wlin.T)
    slab_b = slab_b.at[H, :].set(blin + bext)
    return slab_a, slab_b


@jax.jit
def textrnn_forward(x, slab_a, slab_b):
    """x: [B, T, n_class] float32 (batch_first, like the PyTorch module)."""
    B, T, C = x.shape
    # Peeling hard-assumes only outputs[:, 1, :] is consumed.
    assert T >= 2, "textRNN kernel consumes outputs[:, 1, :]; need SEQ_LEN >= 2"

    # Stack timesteps 0 and 1 into one [2B, 16] block with a constant-1
    # column (bias fold); under jit these tiny preps fuse into one op.
    x2 = jnp.transpose(x[:, :2, :], (1, 0, 2)).reshape(2 * B, C)
    x_aug = jnp.zeros((2 * B, _AUG), jnp.float32)
    x_aug = x_aug.at[:, :C].set(x2)
    x_aug = x_aug.at[:, C].set(1.0)

    vmem = pl.BlockSpec(memory_space=pltpu.MemorySpace.VMEM)
    return pl.pallas_call(
        textrnn_kernel,
        out_shape=jax.ShapeDtypeStruct((B, N_CLASS), jnp.float32),
        in_specs=[vmem, vmem, vmem],
        out_specs=vmem,
    )(x_aug, slab_a, slab_b)


def textrnn_reference(x, params):
    """Pure-JAX reference replicating torch.nn.RNN + Linear + b."""
    wih, whh, bih, bhh, wlin, blin, bext = params
    B, T, C = x.shape
    H = whh.shape[0]
    h = jnp.zeros((B, H), jnp.float32)
    outs = []
    for t in range(T):
        h = jnp.tanh(x[:, t, :] @ wih.T + bih + h @ whh.T + bhh)
        outs.append(h)
    outputs = jnp.stack(outs, axis=1)               # [B, T, H]
    temp = outputs[:, 1, :]                         # temp[i] = outputs[i, 1]
    return temp @ wlin.T + blin + bext


def init_params(key):
    """Deterministic synthetic parameters matching the PyTorch shapes."""
    ks = jax.random.split(key, 6)
    s_rnn = 1.0 / np.sqrt(N_HIDDEN)
    wih = jax.random.uniform(ks[0], (N_HIDDEN, N_CLASS), jnp.float32, -s_rnn, s_rnn)
    whh = jax.random.uniform(ks[1], (N_HIDDEN, N_HIDDEN), jnp.float32, -s_rnn, s_rnn)
    bih = jax.random.uniform(ks[2], (N_HIDDEN,), jnp.float32, -s_rnn, s_rnn)
    bhh = jax.random.uniform(ks[3], (N_HIDDEN,), jnp.float32, -s_rnn, s_rnn)
    wlin = jax.random.uniform(ks[4], (N_CLASS, N_HIDDEN), jnp.float32, -s_rnn, s_rnn)
    blin = jax.random.uniform(ks[5], (N_CLASS,), jnp.float32, -s_rnn, s_rnn)
    bext = jnp.ones((N_CLASS,), jnp.float32)        # nn.Parameter(torch.ones([n_class]))
    return (wih, whh, bih, bhh, wlin, blin, bext)


if __name__ == "__main__":
    key = jax.random.PRNGKey(0)
    k_x, k_p = jax.random.split(key)
    x = jax.random.normal(k_x, (BATCH, SEQ_LEN, N_CLASS), jnp.float32)
    params = init_params(k_p)

    slab_a, slab_b = prepare_params(params)         # one-time packing
    slab_a = jax.block_until_ready(slab_a)
    slab_b = jax.block_until_ready(slab_b)

    out = textrnn_forward(x, slab_a, slab_b)
    out = jax.block_until_ready(out)

    ref = textrnn_reference(x, params)
    np.testing.assert_allclose(np.asarray(out), np.asarray(ref),
                               rtol=1e-5, atol=1e-5)
    assert out.shape == (BATCH, N_CLASS)
    print("KERNEL_OK")
</pallas_src>

<mosaic_0001>
module attributes {stable_mosaic.version = 11 : i64} {
  func.func @textrnn_kernel(%arg0: memref<6x16xf32, #tpu.memory_space<vmem>>, %arg1: memref<48x32xf32, #tpu.memory_space<vmem>>, %arg2: memref<40x8xf32, #tpu.memory_space<vmem>>, %arg3: memref<3x8xf32, #tpu.memory_space<vmem>>) attributes {dimension_semantics = [], scalar_prefetch = 0 : i64, scratch_operands = 0 : i64, tpu.core_type = #tpu.core_type<tc>} {
    %c0 = arith.constant 0 : index
    %c0_0 = arith.constant 0 : index
    %0 = vector.load %arg0[%c0, %c0_0] : memref<6x16xf32, #tpu.memory_space<vmem>>, vector<6x16xf32>
    %c0_1 = arith.constant 0 : index
    %c0_2 = arith.constant 0 : index
    %1 = vector.load %arg1[%c0_1, %c0_2] : memref<48x32xf32, #tpu.memory_space<vmem>>, vector<16x32xf32>
    %cst = arith.constant dense<0.000000e+00> : vector<6x32xf32>
    %2 = tpu.matmul %0, %1, %cst {dimension_numbers = #tpu.dot_dimension_numbers<[1], [0], [0], [1], [0, 0, 1, 1], [], []>} : vector<6x16xf32>, vector<16x32xf32>, vector<6x32xf32> -> vector<6x32xf32>
    %3 = vector.extract_strided_slice %2 {offsets = [0, 0], sizes = [3, 32], strides = [1, 1]} : vector<6x32xf32> to vector<3x32xf32>
    %4 = math.tanh %3 : vector<3x32xf32>
    %5 = vector.extract_strided_slice %2 {offsets = [3, 0], sizes = [3, 32], strides = [1, 1]} : vector<6x32xf32> to vector<3x32xf32>
    %c16 = arith.constant 16 : index
    %c0_3 = arith.constant 0 : index
    %6 = vector.load %arg1[%c16, %c0_3] : memref<48x32xf32, #tpu.memory_space<vmem>>, vector<32x32xf32>
    %cst_4 = arith.constant dense<0.000000e+00> : vector<3x32xf32>
    %7 = tpu.matmul %4, %6, %cst_4 {dimension_numbers = #tpu.dot_dimension_numbers<[1], [0], [0], [1], [0, 0, 1, 1], [], []>} : vector<3x32xf32>, vector<32x32xf32>, vector<3x32xf32> -> vector<3x32xf32>
    %8 = arith.addf %5, %7 : vector<3x32xf32>
    %9 = math.tanh %8 : vector<3x32xf32>
    %c0_5 = arith.constant 0 : index
    %c0_6 = arith.constant 0 : index
    %10 = vector.load %arg2[%c0_5, %c0_6] : memref<40x8xf32, #tpu.memory_space<vmem>>, vector<32x8xf32>
    %cst_7 = arith.constant dense<0.000000e+00> : vector<3x8xf32>
    %11 = tpu.matmul %9, %10, %cst_7 {dimension_numbers = #tpu.dot_dimension_numbers<[1], [0], [0], [1], [0, 0, 1, 1], [], []>} : vector<3x32xf32>, vector<32x8xf32>, vector<3x8xf32> -> vector<3x8xf32>
    %c32 = arith.constant 32 : index
    %c0_8 = arith.constant 0 : index
    %12 = vector.load %arg2[%c32, %c0_8] : memref<40x8xf32, #tpu.memory_space<vmem>>, vector<1x8xf32>
    %13 = vector.broadcast %12 : vector<1x8xf32> to vector<3x8xf32>
    %14 = arith.addf %11, %13 : vector<3x8xf32>
    %c0_9 = arith.constant 0 : index
    %c0_10 = arith.constant 0 : index
    %15 = vector.load %arg3[%c0_9, %c0_10] : memref<3x8xf32, #tpu.memory_space<vmem>>, vector<3x8xf32>
    tpu.vector_store %arg3[%c0_9, %c0_10], %14 {strides = array<i32>} : memref<3x8xf32, #tpu.memory_space<vmem>>, vector<3x8xf32>,
    return
  }
}

</mosaic_0001>

<llo_original>
// kernel: textrnn_forward.1
$region0: #{textrnn_forward.1}
  #allocation0 [shape = 'u32[]', space=smem, size = 0x4, offset = 0x4, fixed_abs, tag = 'smem constant byte address 0x4 - core index']
  #allocation1 [shape = 'u32[144,128]{1,0:T(1,128)}', space=vmem, size = 0x12000, scoped, tag = 'internal scratch']
  %s0 = inlined_call_operand.vmem [shape: f32[6,16], index: 0, kind: input, shape index: {}]
  %s1 = inlined_call_operand.vmem [shape: f32[48,32], index: 1, kind: input, shape index: {}]
  %s2 = inlined_call_operand.vmem [shape: f32[40,8], index: 2, kind: input, shape index: {}]
  %s3 = inlined_call_operand.hbm [shape: f32[3,8], index: 3, kind: output, shape index: {}]
  %s4 = sld [smem:[#allocation0]]
  $region22: #{textrnn_forward.1} parent=0
    _
  %s6 = ssub.s32 1, %s4
  %s7 = scalar_select 0, %s6, %s4
  $region1: #{textrnn_forward.1} parent=0
    #allocation2 [shape = 'u8[2048]{0}', space=vmem, size = 0x800, scoped, tag = 'output window, operand 0, single buffered']
    #allocation3 [shape = 's32[1]{0}', space=sflag, size = 0x4, scoped, tag = 'scoped memory for textrnn_forward.1']
    %8 = vsyncpa [#allocation3], 0
    // Predicated region
    $region2: #{textrnn_forward.1} parent=1 // pred_check
      _
    $region3: #{textrnn_forward.1} parent=1 // pred_check_branch
      %10 = sbr.rel (0) target = $region5
    $region4: #{textrnn_forward.1} parent=1 // pred_region
      _
    $region5: #{textrnn_forward.1} parent=1 // pred_fallthru
      _
    // Predicated region
    $region6: #{textrnn_forward.1} parent=1 // pred_check
      _
    $region7: #{textrnn_forward.1} parent=1 // pred_check_branch
      %12 = sbr.rel (0) target = $region9
    $region8: #{textrnn_forward.1} parent=1 // pred_region
      _
    $region9: #{textrnn_forward.1} parent=1 // pred_fallthru
      _
    // Predicated region
    $region10: #{textrnn_forward.1} parent=1 // pred_check
      _
    $region11: #{textrnn_forward.1} parent=1 // pred_check_branch
      %14 = sbr.rel (0) target = $region13
    $region12: #{textrnn_forward.1} parent=1 // pred_region
      _
    $region13: #{textrnn_forward.1} parent=1 // pred_fallthru
      _
    %v15 = vld [vmem:[%s0] sm:$0x3f]
    %v16 = vld [vmem:[%s1] sm:$0xff]
    %v17 = vld [vmem:[%s1 + $0x8] sm:$0xff]
    %vm18 = vcmask 130048
    %v20 = vsel %vm18, %v15, 0
    %22 = vmatprep.subr.mxu0 0.0
    %23 = vmatpush1.msra.mxu0 0.0
    %24 = vmatprep.subr.mxu0 0.0
    %25 = vmatpush1.msra.mxu0 0.0
    %26 = vmatprep.subr.mxu0 0.0
    %27 = vmatpush1.msra.mxu0 0.0
    %28 = vmatprep.subr.mxu0 0.0
    %29 = vmatpush1.msra.mxu0 0.0
    %30 = vmatprep.subr.mxu0 0.0
    %31 = vmatpush1.msra.mxu0 0.0
    %32 = vmatprep.subr.mxu0 0.0
    %33 = vmatpush1.msra.mxu0 0.0
    %34 = vmatprep.subr.mxu0 0.0
    %35 = vmatpush1.msra.mxu0 0.0
    %36 = vmatprep.subr.mxu0 0.0
    %37 = vmatpush1.msra.mxu0 0.0
    %38 = vmatprep.subr.mxu0 0.0
    %39 = vmatpush1.msra.mxu0 0.0
    %40 = vmatprep.subr.mxu0 0.0
    %41 = vmatpush1.msra.mxu0 0.0
    %42 = vmatprep.subr.mxu0 0.0
    %43 = vmatpush1.msra.mxu0 0.0
    %44 = vmatprep.subr.mxu0 0.0
    %45 = vmatpush1.msra.mxu0 0.0
    %46 = vmatprep.subr.mxu0 0.0
    %47 = vmatpush1.msra.mxu0 0.0
    %48 = vmatprep.subr.mxu0 0.0
    %49 = vmatpush1.msra.mxu0 0.0
    %50 = vmatprep.subr.mxu0 0.0
    %51 = vmatpush1.msra.mxu0 %v17
    %52 = vmatprep.subr.mxu0 0.0
    %53 = vmatpush1.msra.mxu0 %v16
    %54 = vmatprep.subr.mxu0 0.0
    %55 = vmatpush2.msra.mxu0 0.0
    %56 = vmatprep.subr.mxu0 0.0
    %57 = vmatpush2.msra.mxu0 0.0
    %58 = vmatprep.subr.mxu0 0.0
    %59 = vmatpush2.msra.mxu0 0.0
    %60 = vmatprep.subr.mxu0 0.0
    %61 = vmatpush2.msra.mxu0 0.0
    %62 = vmatprep.subr.mxu0 0.0
    %63 = vmatpush2.msra.mxu0 0.0
    %64 = vmatprep.subr.mxu0 0.0
    %65 = vmatpush2.msra.mxu0 0.0
    %66 = vmatprep.subr.mxu0 0.0
    %67 = vmatpush2.msra.mxu0 0.0
    %68 = vmatprep.subr.mxu0 0.0
    %69 = vmatpush2.msra.mxu0 0.0
    %70 = vmatprep.subr.mxu0 0.0
    %71 = vmatpush2.msra.mxu0 0.0
    %72 = vmatprep.subr.mxu0 0.0
    %73 = vmatpush2.msra.mxu0 0.0
    %74 = vmatprep.subr.mxu0 0.0
    %75 = vmatpush2.msra.mxu0 0.0
    %76 = vmatprep.subr.mxu0 0.0
    %77 = vmatpush2.msra.mxu0 0.0
    %78 = vmatprep.subr.mxu0 0.0
    %79 = vmatpush2.msra.mxu0 0.0
    %80 = vmatprep.subr.mxu0 0.0
    %81 = vmatpush2.msra.mxu0 0.0
    %82 = vmatprep.subr.mxu0 0.0
    %83 = vmatpush2.msra.mxu0 0.0
    %84 = vmatprep.subr.mxu0 0.0
    %85 = vmatpush2.msra.mxu0 0.0
    %86 = vmatprep.mubr.f32.mxu0 0.0
    %87 = vmatmul.mubr.f32.gmra.mxu0 %v20
    %v88 = vpop.f32.mrf.mxu0
    %v89 = vadd.f32 0.0, %v88
    %v90 = vpop.f32.mrf.mxu0
    %91 = vdwg.mxu0
    %v92 = vtanh.pop %v89
    %v93 = vld [vmem:[%s1 + $0x10] sm:$0xff]
    %v94 = vld [vmem:[%s1 + $0x18] sm:$0xff]
    %v95 = vld [vmem:[%s1 + $0x20] sm:$0xff]
    %v96 = vld [vmem:[%s1 + $0x28] sm:$0xff]
    %vm97 = vcmask 261120
    %v99 = vsel %vm97, %v92, 0
    %101 = vmatprep.subr.mxu0 0.0
    %102 = vmatpush1.msra.mxu0 0.0
    %103 = vmatprep.subr.mxu0 0.0
    %104 = vmatpush1.msra.mxu0 0.0
    %105 = vmatprep.subr.mxu0 0.0
    %106 = vmatpush1.msra.mxu0 0.0
    %107 = vmatprep.subr.mxu0 0.0
    %108 = vmatpush1.msra.mxu0 0.0
    %109 = vmatprep.subr.mxu0 0.0
    %110 = vmatpush1.msra.mxu0 0.0
    %111 = vmatprep.subr.mxu0 0.0
    %112 = vmatpush1.msra.mxu0 0.0
    %113 = vmatprep.subr.mxu0 0.0
    %114 = vmatpush1.msra.mxu0 0.0
    %115 = vmatprep.subr.mxu0 0.0
    %116 = vmatpush1.msra.mxu0 0.0
    %117 = vmatprep.subr.mxu0 0.0
    %118 = vmatpush1.msra.mxu0 0.0
    %119 = vmatprep.subr.mxu0 0.0
    %120 = vmatpush1.msra.mxu0 0.0
    %121 = vmatprep.subr.mxu0 0.0
    %122 = vmatpush1.msra.mxu0 0.0
    %123 = vmatprep.subr.mxu0 0.0
    %124 = vmatpush1.msra.mxu0 0.0
    %125 = vmatprep.subr.mxu0 0.0
    %126 = vmatpush1.msra.mxu0 %v96
    %127 = vmatprep.subr.mxu0 0.0
    %128 = vmatpush1.msra.mxu0 %v95
    %129 = vmatprep.subr.mxu0 0.0
    %130 = vmatpush1.msra.mxu0 %v94
    %131 = vmatprep.subr.mxu0 0.0
    %132 = vmatpush1.msra.mxu0 %v93
    %133 = vmatprep.subr.mxu0 0.0
    %134 = vmatpush2.msra.mxu0 0.0
    %135 = vmatprep.subr.mxu0 0.0
    %136 = vmatpush2.msra.mxu0 0.0
    %137 = vmatprep.subr.mxu0 0.0
    %138 = vmatpush2.msra.mxu0 0.0
    %139 = vmatprep.subr.mxu0 0.0
    %140 = vmatpush2.msra.mxu0 0.0
    %141 = vmatprep.subr.mxu0 0.0
    %142 = vmatpush2.msra.mxu0 0.0
    %143 = vmatprep.subr.mxu0 0.0
    %144 = vmatpush2.msra.mxu0 0.0
    %145 = vmatprep.subr.mxu0 0.0
    %146 = vmatpush2.msra.mxu0 0.0
    %147 = vmatprep.subr.mxu0 0.0
    %148 = vmatpush2.msra.mxu0 0.0
    %149 = vmatprep.subr.mxu0 0.0
    %150 = vmatpush2.msra.mxu0 0.0
    %151 = vmatprep.subr.mxu0 0.0
    %152 = vmatpush2.msra.mxu0 0.0
    %153 = vmatprep.subr.mxu0 0.0
    %154 = vmatpush2.msra.mxu0 0.0
    %155 = vmatprep.subr.mxu0 0.0
    %156 = vmatpush2.msra.mxu0 0.0
    %157 = vmatprep.subr.mxu0 0.0
    %158 = vmatpush2.msra.mxu0 0.0
    %159 = vmatprep.subr.mxu0 0.0
    %160 = vmatpush2.msra.mxu0 0.0
    %161 = vmatprep.subr.mxu0 0.0
    %162 = vmatpush2.msra.mxu0 0.0
    %163 = vmatprep.subr.mxu0 0.0
    %164 = vmatpush2.msra.mxu0 0.0
    %165 = vmatprep.mubr.f32.mxu0 0.0
    %166 = vmatmul.mubr.f32.gmra.mxu0 %v99
    %v167 = vpop.f32.mrf.mxu0
    %v168 = vadd.f32 0.0, %v167
    %v169 = vpop.f32.mrf.mxu0
    %170 = vdwg.mxu0
    %v172 = vrot.slane %v168, 5
    %v174 = vadd.f32 %v89, %v172
    %v175 = vtanh.pop %v174
    %v176 = vld [vmem:[%s2] sm:$0xff]
    %v177 = vld [vmem:[%s2 + $0x8] sm:$0xff]
    %v178 = vld [vmem:[%s2 + $0x10] sm:$0xff]
    %v179 = vld [vmem:[%s2 + $0x18] sm:$0xff]
    %v180 = vld [vmem:[%s2 + $0x20] sm:$0x1]
    %v181 = vlaneseq
    %v182 = vshrl.u32 %v181, 7
    %v183 = vsub.s32 0, %v182
    %v184 = vrot.slane %v180, %v183
    %v186 = vrot.slane %v175, 3
    %v187 = vsel %vm97, %v186, 0
    %189 = vmatprep.subr.mxu0 0.0
    %190 = vmatpush1.msra.mxu0 0.0
    %191 = vmatprep.subr.mxu0 0.0
    %192 = vmatpush1.msra.mxu0 0.0
    %193 = vmatprep.subr.mxu0 0.0
    %194 = vmatpush1.msra.mxu0 0.0
    %195 = vmatprep.subr.mxu0 0.0
    %196 = vmatpush1.msra.mxu0 0.0
    %197 = vmatprep.subr.mxu0 0.0
    %198 = vmatpush1.msra.mxu0 0.0
    %199 = vmatprep.subr.mxu0 0.0
    %200 = vmatpush1.msra.mxu0 0.0
    %201 = vmatprep.subr.mxu0 0.0
    %202 = vmatpush1.msra.mxu0 0.0
    %203 = vmatprep.subr.mxu0 0.0
    %204 = vmatpush1.msra.mxu0 0.0
    %205 = vmatprep.subr.mxu0 0.0
    %206 = vmatpush1.msra.mxu0 0.0
    %207 = vmatprep.subr.mxu0 0.0
    %208 = vmatpush1.msra.mxu0 0.0
    %209 = vmatprep.subr.mxu0 0.0
    %210 = vmatpush1.msra.mxu0 0.0
    %211 = vmatprep.subr.mxu0 0.0
    %212 = vmatpush1.msra.mxu0 0.0
    %213 = vmatprep.subr.mxu0 0.0
    %214 = vmatpush1.msra.mxu0 %v179
    %215 = vmatprep.subr.mxu0 0.0
    %216 = vmatpush1.msra.mxu0 %v178
    %217 = vmatprep.subr.mxu0 0.0
    %218 = vmatpush1.msra.mxu0 %v177
    %219 = vmatprep.subr.mxu0 0.0
    %220 = vmatpush1.msra.mxu0 %v176
    %221 = vmatprep.subr.mxu0 0.0
    %222 = vmatpush2.msra.mxu0 0.0
    %223 = vmatprep.subr.mxu0 0.0
    %224 = vmatpush2.msra.mxu0 0.0
    %225 = vmatprep.subr.mxu0 0.0
    %226 = vmatpush2.msra.mxu0 0.0
    %227 = vmatprep.subr.mxu0 0.0
    %228 = vmatpush2.msra.mxu0 0.0
    %229 = vmatprep.subr.mxu0 0.0
    %230 = vmatpush2.msra.mxu0 0.0
    %231 = vmatprep.subr.mxu0 0.0
    %232 = vmatpush2.msra.mxu0 0.0
    %233 = vmatprep.subr.mxu0 0.0
    %234 = vmatpush2.msra.mxu0 0.0
    %235 = vmatprep.subr.mxu0 0.0
    %236 = vmatpush2.msra.mxu0 0.0
    %237 = vmatprep.subr.mxu0 0.0
    %238 = vmatpush2.msra.mxu0 0.0
    %239 = vmatprep.subr.mxu0 0.0
    %240 = vmatpush2.msra.mxu0 0.0
    %241 = vmatprep.subr.mxu0 0.0
    %242 = vmatpush2.msra.mxu0 0.0
    %243 = vmatprep.subr.mxu0 0.0
    %244 = vmatpush2.msra.mxu0 0.0
    %245 = vmatprep.subr.mxu0 0.0
    %246 = vmatpush2.msra.mxu0 0.0
    %247 = vmatprep.subr.mxu0 0.0
    %248 = vmatpush2.msra.mxu0 0.0
    %249 = vmatprep.subr.mxu0 0.0
    %250 = vmatpush2.msra.mxu0 0.0
    %251 = vmatprep.subr.mxu0 0.0
    %252 = vmatpush2.msra.mxu0 0.0
    %253 = vmatprep.mubr.f32.mxu0 0.0
    %254 = vmatmul.mubr.f32.gmra.mxu0 %v187
    %v255 = vpop.f32.mrf.mxu0
    %v256 = vadd.f32 %v184, %v255
    %v257 = vpop.f32.mrf.mxu0
    %258 = vdwg.mxu0
    %vm259 = vcmask 59392
    %260 = vst.msk [vmem:[#allocation2] sm:$0x7] %vm259, %v256
    // Predicated region
    $region14: #{textrnn_forward.1} parent=1 // pred_check
      _
    $region15: #{textrnn_forward.1} parent=1 // pred_check_branch
      %262 = sbr.rel (0) target = $region17
    $region16: #{textrnn_forward.1} parent=1 // pred_region
      %s264 = ssub.s32 64, 64
      %265 = vsyncadd [#allocation3], %s264
      %s267 = sshll.u32 [#allocation2], 4
      %s268 = int_to_ptr.vmem [resolvable:$true] %s267
      %270 = dma.vmem_to_hbm [thread:$0]  %s268, 64, %s3, [#allocation3]
    $region17: #{textrnn_forward.1} parent=1 // pred_fallthru
      _
    // Predicated region
    $region18: #{textrnn_forward.1} parent=1 // pred_check
      _
    $region19: #{textrnn_forward.1} parent=1 // pred_check_branch
      %272 = sbr.rel (0) target = $region21
    $region20: #{textrnn_forward.1} parent=1 // pred_region
      %273 = dma.done [#allocation3], 64
    $region21: #{textrnn_forward.1} parent=1 // pred_fallthru
      _
    %274 = vsyncpa [#allocation3], 1

</llo_original>
